<compile_context>
chip_gen: v7x
topology: tpu7x:2x2x1
jax: 0.10.0
libtpu: 0.0.40
codegen_flags: <defaults>
</compile_context>

<pallas_src>
import functools

import jax
import jax.numpy as jnp
from jax.experimental import pallas as pl
from jax.experimental.pallas import tpu as pltpu

LANE = 128


def _round_up(n, m):
    return (n + m - 1) // m * m


def _silu(v):
    return v * jax.nn.sigmoid(v)


def _layout(dims):
    in_dim, h_dim, out_dim, time_dim, condition_dim = dims
    used = in_dim + time_dim + condition_dim + 1       # +1 lane carries condition_mask
    act_lanes = _round_up(used, LANE)                  # 128 at the demo dims
    h_pad = _round_up(h_dim, LANE)
    out_pad = _round_up(out_dim, LANE)
    d_pad = max(h_pad, out_pad)
    w_rows = 2 * act_lanes + h_pad                     # [W1-block | Wtc-block | W2-block]
    return used, act_lanes, h_pad, out_pad, d_pad, w_rows


def _make_kernel(dims):
    in_dim, h_dim, out_dim, time_dim, condition_dim = dims
    used, act_lanes, h_pad, out_pad, d_pad, w_rows = _layout(dims)
    mask_lane = in_dim + time_dim + condition_dim

    def kernel(act_ref, w_ref, b_ref, o_ref):
        act_bf = act_ref[...]                          # (TB, act_lanes) bf16
        act = act_bf.astype(jnp.float32)
        mask = act[:, mask_lane:mask_lane + 1]         # (TB, 1) 0/1 condition_mask

        b = b_ref[...]                                 # (8, d_pad) f32
        b1, bt, bc = b[0:1, :h_pad], b[1:2, :h_pad], b[2:3, :h_pad]
        b2, gamma, beta = b[3:4, :out_pad], b[4:5, :out_pad], b[5:6, :out_pad]
        cond_ind = b[6:7, :act_lanes]                  # 1.0 on the condition lanes
        out_ind = b[7:8, :out_pad]                     # 1.0 on the real out_dim lanes

        w1 = w_ref[0:act_lanes, :h_pad]                          # bf16; t/c/mask rows zero
        wtc = w_ref[act_lanes:2 * act_lanes, :h_pad]             # bf16; x/mask rows zero
        w2 = w_ref[2 * act_lanes:2 * act_lanes + h_pad, :out_pad]

        # h = silu(x @ W1 + b1): t/c/mask lanes hit all-zero rows of the W1 block.
        h = jnp.dot(act_bf, w1, preferred_element_type=jnp.float32) + b1
        h = _silu(h)

        # Fused time/condition projection on the SAME 128-lane operand:
        #   silu(t) @ Wt + bt  +  (silu(c) @ Wc + bc) * mask
        # x/mask lanes hit all-zero rows of the Wtc block.  The row-scalar mask is
        # applied pre-dot via the indicator row (exact for a 0/1 mask, algebraically
        # identical to the module's post-Linear multiply) and to bc post-dot.
        s = _silu(act)                                 # f32 elementwise (v5e-safe)
        s = s * (1.0 + cond_ind * (mask - 1.0))        # cond lanes *= mask, others *= 1
        h = h + jnp.dot(s.astype(jnp.bfloat16), wtc,
                        preferred_element_type=jnp.float32) + bt + bc * mask

        # y = h @ W2 + b2 ; dropout(p=0) is the identity.
        # TODO(synk): training-mode dropout (p>0) would need pltpu.prng_* in-kernel;
        #             EmbedX constructs nn.Dropout(0) so it is an identity here.
        y = jnp.dot(h.astype(jnp.bfloat16), w2,
                    preferred_element_type=jnp.float32) + b2

        # LayerNorm(eps=1e-6, biased variance) over the real out_dim lanes only.
        # The mean relies on padded y lanes being exactly zero (W2 pad columns and
        # b2 pad lanes are zero -- asserted in pack_params).  Padded BATCH rows give
        # finite (garbage) values and are sliced away in the wrapper.
        mean = jnp.sum(y, axis=-1, keepdims=True) * (1.0 / out_dim)
        dev = (y - mean) * out_ind                     # zero the padded lanes
        var = jnp.sum(dev * dev, axis=-1, keepdims=True) * (1.0 / out_dim)
        yn = dev * jax.lax.rsqrt(var + 1e-6) * gamma + beta
        o_ref[...] = _silu(yn).astype(o_ref.dtype)     # bf16 store, 128 dense lanes

    return kernel


@functools.partial(jax.jit, static_argnames=("dims",))
def embedx_forward(x, timestep, condition, condition_mask, w_slab, b_slab, *, dims):
    in_dim, h_dim, out_dim, time_dim, condition_dim = dims
    used, act_lanes, h_pad, out_pad, d_pad, w_rows = _layout(dims)

    B = x.shape[0]
    b8 = _round_up(B, 8)
    # Batch tile: big enough to amortise the ~0.35 us/grid-step overhead (cap 512),
    # and sized so any non-trivial batch gives >= 2 grid steps so the "parallel"
    # dimension can shard across v7x's two TensorCores.
    tb = b8 if b8 <= 8 else min(512, _round_up((b8 + 1) // 2, 8))
    b_pad = _round_up(b8, tb)

    # ONE lane-dense bf16 activation slab: [ x | t | c | mask | pad ].
    act = jnp.concatenate(
        [x.astype(jnp.float32),
         timestep.astype(jnp.float32),
         condition.astype(jnp.float32),
         condition_mask.astype(jnp.float32)[:, None]], axis=-1)
    act = jnp.pad(act, ((0, b_pad - B), (0, act_lanes - used))).astype(jnp.bfloat16)

    out = pl.pallas_call(
        _make_kernel(dims),
        out_shape=jax.ShapeDtypeStruct((b_pad, out_pad), jnp.bfloat16),
        grid_spec=pltpu.PrefetchScalarGridSpec(
            num_scalar_prefetch=0,
            grid=(b_pad // tb,),
            in_specs=[
                pl.BlockSpec((tb, act_lanes), lambda i: (i, 0)),   # batch-tiled acts
                pl.BlockSpec((w_rows, d_pad), lambda i: (0, 0)),   # resident weights
                pl.BlockSpec((8, d_pad), lambda i: (0, 0)),        # resident biases
            ],
            out_specs=pl.BlockSpec((tb, out_pad), lambda i: (i, 0)),
        ),
        compiler_params=pltpu.CompilerParams(
            dimension_semantics=("parallel",)),   # shards batch tiles on v7x megacore
    )(act, w_slab, b_slab)

    return out[:B, :out_dim]


def init_params(key, dims):
    """Synthetic parameters with PyTorch-default-Linear-like init.
    Linear weights are stored (in_features, out_features) so the math is x @ W + b."""
    in_dim, h_dim, out_dim, time_dim, condition_dim = dims
    ks = jax.random.split(key, 4)

    def lin(k, fan_in, fan_out):
        bound = 1.0 / jnp.sqrt(fan_in)
        kw, kb = jax.random.split(k)
        w = jax.random.uniform(kw, (fan_in, fan_out), jnp.float32, -bound, bound)
        b = jax.random.uniform(kb, (1, fan_out), jnp.float32, -bound, bound)
        return w, b

    w1, b1 = lin(ks[0], in_dim, h_dim)
    wt, bt = lin(ks[1], time_dim, h_dim)
    wc, bc = lin(ks[2], condition_dim, h_dim)
    w2, b2 = lin(ks[3], h_dim, out_dim)
    gamma = jnp.ones((1, out_dim), jnp.float32)    # nn.LayerNorm default init
    beta = jnp.zeros((1, out_dim), jnp.float32)
    return dict(w1=w1, b1=b1, wt=wt, bt=bt, wc=wc, bc=bc,
                w2=w2, b2=b2, gamma=gamma, beta=beta)


def pack_params(params, dims):
    """One-time packing into 2 resident slabs (3 kernel inputs total incl. activations).

    Weight slab (bf16, lane-dense 128-col blocks):
      rows [0, act_lanes)           : W1 at the x lanes      (t/c/mask rows are ZERO)
      rows [act_lanes, 2*act_lanes) : Wt / Wc at the t/c lanes (x/mask rows are ZERO)
      rows [2*act_lanes, +h_pad)    : W2
    Bias slab (8, d_pad) f32: b1, bt, bc, b2, gamma, beta, cond-indicator, out-indicator.
    """
    in_dim, h_dim, out_dim, time_dim, condition_dim = dims
    used, act_lanes, h_pad, out_pad, d_pad, w_rows = _layout(dims)
    t0 = in_dim
    c0 = in_dim + time_dim
    m0 = c0 + condition_dim                      # mask lane

    w = jnp.zeros((w_rows, d_pad), jnp.float32)
    w = w.at[:in_dim, :h_dim].set(params["w1"])
    w = w.at[act_lanes + t0:act_lanes + c0, :h_dim].set(params["wt"])
    w = w.at[act_lanes + c0:act_lanes + m0, :h_dim].set(params["wc"])
    w = w.at[2 * act_lanes:2 * act_lanes + h_dim, :out_dim].set(params["w2"])
    w = w.astype(jnp.bfloat16)   # MXU operand dtype; accumulation stays f32 in-kernel

    b = jnp.zeros((8, d_pad), jnp.float32)
    b = b.at[0, :h_dim].set(params["b1"][0])
    b = b.at[1, :h_dim].set(params["bt"][0])
    b = b.at[2, :h_dim].set(params["bc"][0])
    b = b.at[3, :out_dim].set(params["b2"][0])
    b = b.at[4, :out_dim].set(params["gamma"][0])
    b = b.at[5, :out_dim].set(params["beta"][0])
    b = b.at[6, c0:m0].set(1.0)                  # condition-lane indicator (over act lanes)
    b = b.at[7, :out_dim].set(1.0)               # valid-output-lane indicator

    # The in-kernel LayerNorm mean assumes padded y lanes are exactly zero, which
    # requires the W2 pad columns and the b2 pad lanes to stay zero.  Guard it.
    assert bool(jnp.all(w[2 * act_lanes:, out_dim:] == 0))
    assert bool(jnp.all(b[3, out_dim:] == 0))
    return w, b


if __name__ == "__main__":
    dims = (32, 64, 32, 16, 24)   # (in_dim, h_dim, out_dim, time_dim, condition_dim)
    in_dim, h_dim, out_dim, time_dim, condition_dim = dims
    B = 8

    key = jax.random.PRNGKey(0)
    k_x, k_t, k_c, k_m, k_p = jax.random.split(key, 5)
    x = jax.random.normal(k_x, (B, in_dim), jnp.float32)
    timestep = jax.random.normal(k_t, (B, time_dim), jnp.float32)
    condition = jax.random.normal(k_c, (B, condition_dim), jnp.float32)
    condition_mask = (jax.random.uniform(k_m, (B,)) > 0.5).astype(jnp.float32)

    params = init_params(k_p, dims)
    w_slab, b_slab = pack_params(params, dims)

    out = embedx_forward(x, timestep, condition, condition_mask,
                         w_slab, b_slab, dims=dims)
    out = jax.block_until_ready(out)

    # Pure-JAX reference, faithful to the PyTorch module structure (unfused time /
    # condition projections, mask applied after the condition Linear, f32 elementwise).
    # bf16 casts at the dots mirror MXU operand precision; tolerance additionally
    # covers the kernel's bf16 activation slab, fused-h re-quantization and bf16
    # output store, amplified by LayerNorm's 1/std.
    def ref(x, t, c, m, p):
        silu = lambda v: v * jax.nn.sigmoid(v)
        bf = lambda a: a.astype(jnp.bfloat16)
        dot = lambda a, w: jnp.dot(bf(a), bf(w), preferred_element_type=jnp.float32)
        h = silu(dot(x, p["w1"]) + p["b1"])
        te = dot(silu(t), p["wt"]) + p["bt"]
        ce = (dot(silu(c), p["wc"]) + p["bc"]) * m[:, None]
        h = h + te + ce
        y = dot(h, p["w2"]) + p["b2"]              # dropout(p=0) == identity
        mu = y.mean(-1, keepdims=True)
        var = ((y - mu) ** 2).mean(-1, keepdims=True)
        yn = (y - mu) * jax.lax.rsqrt(var + 1e-6) * p["gamma"] + p["beta"]
        return silu(yn)

    expected = ref(x, timestep, condition, condition_mask, params)
    out_f32 = out.astype(jnp.float32)
    assert out.shape == (B, out_dim)
    assert out.dtype == jnp.bfloat16
    max_err = float(jnp.max(jnp.abs(out_f32 - expected)))
    assert jnp.allclose(out_f32, expected, atol=2.5e-2, rtol=2.5e-2), max_err

    print("KERNEL_OK")
</pallas_src>

<mosaic_0001>
module attributes {stable_mosaic.version = 11 : i64} {
  func.func @kernel(%arg0: i32, %arg1: memref<8x128xbf16, #tpu.memory_space<vmem>>, %arg2: memref<384x128xbf16, #tpu.memory_space<vmem>>, %arg3: memref<8x128xf32, #tpu.memory_space<vmem>>, %arg4: memref<8x128xbf16, #tpu.memory_space<vmem>>) attributes {dimension_semantics = [#tpu.dimension_semantics<parallel>], iteration_bounds = array<i64: 1>, scalar_prefetch = 0 : i64, scratch_operands = 0 : i64, tpu.core_type = #tpu.core_type<tc>, window_params = [{transform_indices = @transform_0, window_bounds = array<i64: 8, 128>}, {pipeline_mode = #tpu.pipeline_mode<synchronous>, transform_indices = @transform_1, window_bounds = array<i64: 384, 128>}, {pipeline_mode = #tpu.pipeline_mode<synchronous>, transform_indices = @transform_2, window_bounds = array<i64: 8, 128>}, {transform_indices = @transform_3, window_bounds = array<i64: 8, 128>}]} {
    %c0 = arith.constant 0 : index
    %c0_0 = arith.constant 0 : index
    %0 = vector.load %arg1[%c0, %c0_0] : memref<8x128xbf16, #tpu.memory_space<vmem>>, vector<8x128xbf16>
    %1 = arith.extf %0 : vector<8x128xbf16> to vector<8x128xf32>
    %2 = vector.extract_strided_slice %1 {offsets = [0, 72], sizes = [8, 1], strides = [1, 1]} : vector<8x128xf32> to vector<8x1xf32>
    %c0_1 = arith.constant 0 : index
    %c0_2 = arith.constant 0 : index
    %3 = vector.load %arg3[%c0_1, %c0_2] : memref<8x128xf32, #tpu.memory_space<vmem>>, vector<8x128xf32>
    %4 = vector.extract_strided_slice %3 {offsets = [0, 0], sizes = [1, 128], strides = [1, 1]} : vector<8x128xf32> to vector<1x128xf32>
    %5 = vector.extract_strided_slice %3 {offsets = [1, 0], sizes = [1, 128], strides = [1, 1]} : vector<8x128xf32> to vector<1x128xf32>
    %6 = vector.extract_strided_slice %3 {offsets = [2, 0], sizes = [1, 128], strides = [1, 1]} : vector<8x128xf32> to vector<1x128xf32>
    %7 = vector.extract_strided_slice %3 {offsets = [3, 0], sizes = [1, 128], strides = [1, 1]} : vector<8x128xf32> to vector<1x128xf32>
    %8 = vector.extract_strided_slice %3 {offsets = [4, 0], sizes = [1, 128], strides = [1, 1]} : vector<8x128xf32> to vector<1x128xf32>
    %9 = vector.extract_strided_slice %3 {offsets = [5, 0], sizes = [1, 128], strides = [1, 1]} : vector<8x128xf32> to vector<1x128xf32>
    %10 = vector.extract_strided_slice %3 {offsets = [6, 0], sizes = [1, 128], strides = [1, 1]} : vector<8x128xf32> to vector<1x128xf32>
    %11 = vector.extract_strided_slice %3 {offsets = [7, 0], sizes = [1, 128], strides = [1, 1]} : vector<8x128xf32> to vector<1x128xf32>
    %c0_3 = arith.constant 0 : index
    %c0_4 = arith.constant 0 : index
    %12 = vector.load %arg2[%c0_3, %c0_4] : memref<384x128xbf16, #tpu.memory_space<vmem>>, vector<128x128xbf16>
    %c128 = arith.constant 128 : index
    %c0_5 = arith.constant 0 : index
    %13 = vector.load %arg2[%c128, %c0_5] : memref<384x128xbf16, #tpu.memory_space<vmem>>, vector<128x128xbf16>
    %c256 = arith.constant 256 : index
    %c0_6 = arith.constant 0 : index
    %14 = vector.load %arg2[%c256, %c0_6] : memref<384x128xbf16, #tpu.memory_space<vmem>>, vector<128x128xbf16>
    %cst = arith.constant dense<0.000000e+00> : vector<8x128xf32>
    %15 = tpu.matmul %0, %12, %cst {dimension_numbers = #tpu.dot_dimension_numbers<[1], [0], [0], [1], [0, 0, 1, 1], [], []>} : vector<8x128xbf16>, vector<128x128xbf16>, vector<8x128xf32> -> vector<8x128xf32>
    %16 = vector.broadcast %4 : vector<1x128xf32> to vector<8x128xf32>
    %17 = arith.addf %15, %16 : vector<8x128xf32>
    %18 = arith.negf %17 : vector<8x128xf32>
    %19 = math.exp %18 : vector<8x128xf32>
    %cst_7 = arith.constant 1.000000e+00 : f32
    %20 = vector.broadcast %cst_7 : f32 to vector<8x128xf32>
    %21 = arith.addf %20, %19 : vector<8x128xf32>
    %22 = arith.divf %20, %21 : vector<8x128xf32>
    %23 = arith.mulf %17, %22 : vector<8x128xf32>
    %24 = arith.negf %1 : vector<8x128xf32>
    %25 = math.exp %24 : vector<8x128xf32>
    %cst_8 = arith.constant 1.000000e+00 : f32
    %26 = vector.broadcast %cst_8 : f32 to vector<8x128xf32>
    %27 = arith.addf %26, %25 : vector<8x128xf32>
    %28 = arith.divf %26, %27 : vector<8x128xf32>
    %29 = arith.mulf %1, %28 : vector<8x128xf32>
    %cst_9 = arith.constant 1.000000e+00 : f32
    %30 = vector.broadcast %cst_9 : f32 to vector<8x1xf32>
    %31 = arith.subf %2, %30 : vector<8x1xf32>
    %32 = vector.broadcast %10 : vector<1x128xf32> to vector<8x128xf32>
    %33 = vector.broadcast %31 : vector<8x1xf32> to vector<8x128xf32>
    %34 = arith.mulf %32, %33 : vector<8x128xf32>
    %cst_10 = arith.constant 1.000000e+00 : f32
    %35 = vector.broadcast %cst_10 : f32 to vector<8x128xf32>
    %36 = arith.addf %35, %34 : vector<8x128xf32>
    %37 = arith.mulf %29, %36 : vector<8x128xf32>
    %38 = arith.truncf %37 : vector<8x128xf32> to vector<8x128xbf16>
    %cst_11 = arith.constant dense<0.000000e+00> : vector<8x128xf32>
    %39 = tpu.matmul %38, %13, %cst_11 {dimension_numbers = #tpu.dot_dimension_numbers<[1], [0], [0], [1], [0, 0, 1, 1], [], []>} : vector<8x128xbf16>, vector<128x128xbf16>, vector<8x128xf32> -> vector<8x128xf32>
    %40 = arith.addf %23, %39 : vector<8x128xf32>
    %41 = vector.broadcast %5 : vector<1x128xf32> to vector<8x128xf32>
    %42 = arith.addf %40, %41 : vector<8x128xf32>
    %43 = vector.broadcast %6 : vector<1x128xf32> to vector<8x128xf32>
    %44 = vector.broadcast %2 : vector<8x1xf32> to vector<8x128xf32>
    %45 = arith.mulf %43, %44 : vector<8x128xf32>
    %46 = arith.addf %42, %45 : vector<8x128xf32>
    %47 = arith.truncf %46 : vector<8x128xf32> to vector<8x128xbf16>
    %cst_12 = arith.constant dense<0.000000e+00> : vector<8x128xf32>
    %48 = tpu.matmul %47, %14, %cst_12 {dimension_numbers = #tpu.dot_dimension_numbers<[1], [0], [0], [1], [0, 0, 1, 1], [], []>} : vector<8x128xbf16>, vector<128x128xbf16>, vector<8x128xf32> -> vector<8x128xf32>
    %49 = vector.broadcast %7 : vector<1x128xf32> to vector<8x128xf32>
    %50 = arith.addf %48, %49 : vector<8x128xf32>
    %cst_13 = arith.constant dense<0.000000e+00> : vector<8xf32>
    %51 = vector.multi_reduction <add>, %50, %cst_13 [1] : vector<8x128xf32> to vector<8xf32>
    %52 = vector.shape_cast %51 : vector<8xf32> to vector<8x1xf32>
    %cst_14 = arith.constant 3.125000e-02 : f32
    %53 = vector.broadcast %cst_14 : f32 to vector<8x1xf32>
    %54 = arith.mulf %52, %53 : vector<8x1xf32>
    %55 = vector.broadcast %54 : vector<8x1xf32> to vector<8x128xf32>
    %56 = arith.subf %50, %55 : vector<8x128xf32>
    %57 = vector.broadcast %11 : vector<1x128xf32> to vector<8x128xf32>
    %58 = arith.mulf %56, %57 : vector<8x128xf32>
    %59 = arith.mulf %58, %58 : vector<8x128xf32>
    %cst_15 = arith.constant dense<0.000000e+00> : vector<8xf32>
    %60 = vector.multi_reduction <add>, %59, %cst_15 [1] : vector<8x128xf32> to vector<8xf32>
    %61 = vector.shape_cast %60 : vector<8xf32> to vector<8x1xf32>
    %cst_16 = arith.constant 3.125000e-02 : f32
    %62 = vector.broadcast %cst_16 : f32 to vector<8x1xf32>
    %63 = arith.mulf %61, %62 : vector<8x1xf32>
    %cst_17 = arith.constant 9.99999997E-7 : f32
    %64 = vector.broadcast %cst_17 : f32 to vector<8x1xf32>
    %65 = arith.addf %63, %64 : vector<8x1xf32>
    %66 = math.rsqrt %65 : vector<8x1xf32>
    %67 = vector.broadcast %66 : vector<8x1xf32> to vector<8x128xf32>
    %68 = arith.mulf %58, %67 : vector<8x128xf32>
    %69 = vector.broadcast %8 : vector<1x128xf32> to vector<8x128xf32>
    %70 = arith.mulf %68, %69 : vector<8x128xf32>
    %71 = vector.broadcast %9 : vector<1x128xf32> to vector<8x128xf32>
    %72 = arith.addf %70, %71 : vector<8x128xf32>
    %73 = arith.negf %72 : vector<8x128xf32>
    %74 = math.exp %73 : vector<8x128xf32>
    %cst_18 = arith.constant 1.000000e+00 : f32
    %75 = vector.broadcast %cst_18 : f32 to vector<8x128xf32>
    %76 = arith.addf %75, %74 : vector<8x128xf32>
    %77 = arith.divf %75, %76 : vector<8x128xf32>
    %78 = arith.mulf %72, %77 : vector<8x128xf32>
    %79 = arith.truncf %78 : vector<8x128xf32> to vector<8x128xbf16>
    %c0_19 = arith.constant 0 : index
    %c0_20 = arith.constant 0 : index
    %80 = vector.load %arg4[%c0_19, %c0_20] : memref<8x128xbf16, #tpu.memory_space<vmem>>, vector<8x128xbf16>
    tpu.vector_store %arg4[%c0_19, %c0_20], %79 {strides = array<i32>} : memref<8x128xbf16, #tpu.memory_space<vmem>>, vector<8x128xbf16>,
    return
  }
  func.func @transform_0(%arg0: i32) -> (i32, i32) {
    %c0_i32 = arith.constant 0 : i32
    %c0_i32_0 = arith.constant 0 : i32
    return %arg0, %c0_i32 : i32, i32
  }
  func.func @transform_1(%arg0: i32) -> (i32, i32) {
    %c0_i32 = arith.constant 0 : i32
    %c0_i32_0 = arith.constant 0 : i32
    %c0_i32_1 = arith.constant 0 : i32
    return %c0_i32, %c0_i32_0 : i32, i32
  }
  func.func @transform_2(%arg0: i32) -> (i32, i32) {
    %c0_i32 = arith.constant 0 : i32
    %c0_i32_0 = arith.constant 0 : i32
    %c0_i32_1 = arith.constant 0 : i32
    return %c0_i32, %c0_i32_0 : i32, i32
  }
  func.func @transform_3(%arg0: i32) -> (i32, i32) {
    %c0_i32 = arith.constant 0 : i32
    %c0_i32_0 = arith.constant 0 : i32
    return %arg0, %c0_i32 : i32, i32
  }
}

</mosaic_0001>

<llo_original>
// kernel: embedx_forward.1
$region0: #{embedx_forward.1}
  #allocation0 [shape = 'u32[]', space=smem, size = 0x4, offset = 0x4, fixed_abs, tag = 'smem constant byte address 0x4 - core index']
  #allocation1 [shape = 'u32[144,128]{1,0:T(1,128)}', space=vmem, size = 0x12000, scoped, tag = 'internal scratch']
  %s0 = inlined_call_operand.vmem [shape: bf16[8,128], index: 0, kind: input, shape index: {}]
  %s1 = inlined_call_operand.hbm [shape: bf16[384,128], index: 1, kind: input, shape index: {}]
  %s2 = inlined_call_operand.vmem [shape: f32[8,128], index: 2, kind: input, shape index: {}]
  %s3 = inlined_call_operand.hbm [shape: bf16[8,128], index: 3, kind: output, shape index: {}]
  %s4 = sld [smem:[#allocation0]]
  $region26: #{embedx_forward.1} parent=0
    _
  %s6 = ssub.s32 1, %s4
  %s7 = scalar_select 0, %s6, %s4
  $region1: #{embedx_forward.1} parent=0
    #allocation2 [shape = 'u8[98304]{0}', space=vmem, size = 0x18000, scoped, tag = 'input window, operand 1, single buffered']
    #allocation3 [shape = 's32[1]{0}', space=sflag, size = 0x4, scoped, tag = 'scoped memory for embedx_forward.1']
    #allocation4 [shape = 's32[1]{0}', space=sflag, size = 0x4, scoped, tag = 'scoped memory for embedx_forward.1']
    #allocation5 [shape = 'u8[2048]{0}', space=vmem, size = 0x800, scoped, tag = 'output window, operand 0, single buffered']
    %8 = vsyncpa [#allocation3], 0
    %9 = vsyncpa [#allocation4], 0
    // Predicated region
    $region2: #{embedx_forward.1} parent=1 // pred_check
      _
    $region3: #{embedx_forward.1} parent=1 // pred_check_branch
      %11 = sbr.rel (0) target = $region5
    $region4: #{embedx_forward.1} parent=1 // pred_region
      _
    $region5: #{embedx_forward.1} parent=1 // pred_fallthru
      _
    // Predicated region
    $region6: #{embedx_forward.1} parent=1 // pred_check
      _
    $region7: #{embedx_forward.1} parent=1 // pred_check_branch
      %13 = sbr.rel (0) target = $region9
    $region8: #{embedx_forward.1} parent=1 // pred_region
      %s15 = ssub.s32 3072, 3072
      %16 = vsyncadd [#allocation3], %s15
      %s17 = sshll.u32 [#allocation2], 4
      %s18 = int_to_ptr.vmem [resolvable:$true] %s17
      %23 = dma.hbm_to_vmem [thread:$0]  %s1, 3072, %s18, [#allocation3], 64, 64, 4
    $region9: #{embedx_forward.1} parent=1 // pred_fallthru
      _
    // Predicated region
    $region10: #{embedx_forward.1} parent=1 // pred_check
      _
    $region11: #{embedx_forward.1} parent=1 // pred_check_branch
      %25 = sbr.rel (0) target = $region13
    $region12: #{embedx_forward.1} parent=1 // pred_region
      _
    $region13: #{embedx_forward.1} parent=1 // pred_fallthru
      _
    // Predicated region
    $region14: #{embedx_forward.1} parent=1 // pred_check
      _
    $region15: #{embedx_forward.1} parent=1 // pred_check_branch
      %27 = sbr.rel (0) target = $region17
    $region16: #{embedx_forward.1} parent=1 // pred_region
      %28 = dma.done [#allocation3], 3072
    $region17: #{embedx_forward.1} parent=1 // pred_fallthru
      _
    %v30 = vld [vmem:[%s0] sm:$0xf]
    %v31 = vunpack.c.l.bf16 %v30
    %v32 = vld [vmem:[%s2] sm:$0xff]
    %v33 = vld [vmem:[#allocation2] sm:$0xf]
    %v34 = vld [vmem:[#allocation2 + $0x4] sm:$0xf]
    %v35 = vld [vmem:[#allocation2 + $0x8] sm:$0xf]
    %v36 = vld [vmem:[#allocation2 + $0xc] sm:$0xf]
    %v37 = vld [vmem:[#allocation2 + $0x10] sm:$0xf]
    %v38 = vld [vmem:[#allocation2 + $0x14] sm:$0xf]
    %v39 = vld [vmem:[#allocation2 + $0x18] sm:$0xf]
    %v40 = vld [vmem:[#allocation2 + $0x1c] sm:$0xf]
    %v41 = vld [vmem:[#allocation2 + $0x20] sm:$0xf]
    %v42 = vld [vmem:[#allocation2 + $0x24] sm:$0xf]
    %v43 = vld [vmem:[#allocation2 + $0x28] sm:$0xf]
    %v44 = vld [vmem:[#allocation2 + $0x2c] sm:$0xf]
    %v45 = vld [vmem:[#allocation2 + $0x30] sm:$0xf]
    %v46 = vld [vmem:[#allocation2 + $0x34] sm:$0xf]
    %v47 = vld [vmem:[#allocation2 + $0x38] sm:$0xf]
    %v48 = vld [vmem:[#allocation2 + $0x3c] sm:$0xf]
    %v49 = vld [vmem:[#allocation2 + $0x40] sm:$0xf]
    %v50 = vld [vmem:[#allocation2 + $0x44] sm:$0xf]
    %v51 = vld [vmem:[#allocation2 + $0x48] sm:$0xf]
    %v52 = vld [vmem:[#allocation2 + $0x4c] sm:$0xf]
    %v53 = vld [vmem:[#allocation2 + $0x50] sm:$0xf]
    %v54 = vld [vmem:[#allocation2 + $0x54] sm:$0xf]
    %v55 = vld [vmem:[#allocation2 + $0x58] sm:$0xf]
    %v56 = vld [vmem:[#allocation2 + $0x5c] sm:$0xf]
    %v57 = vld [vmem:[#allocation2 + $0x60] sm:$0xf]
    %v58 = vld [vmem:[#allocation2 + $0x64] sm:$0xf]
    %v59 = vld [vmem:[#allocation2 + $0x68] sm:$0xf]
    %v60 = vld [vmem:[#allocation2 + $0x6c] sm:$0xf]
    %v61 = vld [vmem:[#allocation2 + $0x70] sm:$0xf]
    %v62 = vld [vmem:[#allocation2 + $0x74] sm:$0xf]
    %v63 = vld [vmem:[#allocation2 + $0x78] sm:$0xf]
    %v64 = vld [vmem:[#allocation2 + $0x7c] sm:$0xf]
    %v65 = vld [vmem:[#allocation2 + $0x80] sm:$0xf]
    %v66 = vld [vmem:[#allocation2 + $0x84] sm:$0xf]
    %v67 = vld [vmem:[#allocation2 + $0x88] sm:$0xf]
    %v68 = vld [vmem:[#allocation2 + $0x8c] sm:$0xf]
    %v69 = vld [vmem:[#allocation2 + $0x90] sm:$0xf]
    %v70 = vld [vmem:[#allocation2 + $0x94] sm:$0xf]
    %v71 = vld [vmem:[#allocation2 + $0x98] sm:$0xf]
    %v72 = vld [vmem:[#allocation2 + $0x9c] sm:$0xf]
    %v73 = vld [vmem:[#allocation2 + $0xa0] sm:$0xf]
    %v74 = vld [vmem:[#allocation2 + $0xa4] sm:$0xf]
    %v75 = vld [vmem:[#allocation2 + $0xa8] sm:$0xf]
    %v76 = vld [vmem:[#allocation2 + $0xac] sm:$0xf]
    %v77 = vld [vmem:[#allocation2 + $0xb0] sm:$0xf]
    %v78 = vld [vmem:[#allocation2 + $0xb4] sm:$0xf]
    %v79 = vld [vmem:[#allocation2 + $0xb8] sm:$0xf]
    %v80 = vld [vmem:[#allocation2 + $0xbc] sm:$0xf]
    %v81 = vlaneseq
    %v82 = vshrl.u32 %v81, 7
    %v83 = vsub.s32 0, %v82
    %v84 = vrot.slane %v32, %v83
    %v101 = vunpack.c.l.b16 %v33
    %v102 = vunpack.c.l.b16 %v34
    %v103 = vunpack.c.l.b16 %v35
    %v104 = vunpack.c.l.b16 %v36
    %v105 = vunpack.c.l.b16 %v37
    %v106 = vunpack.c.l.b16 %v38
    %v107 = vunpack.c.l.b16 %v39
    %v108 = vunpack.c.l.b16 %v40
    %v109 = vunpack.c.l.b16 %v41
    %v110 = vunpack.c.l.b16 %v42
    %v111 = vunpack.c.l.b16 %v43
    %v112 = vunpack.c.l.b16 %v44
    %v113 = vunpack.c.l.b16 %v45
    %v114 = vunpack.c.l.b16 %v46
    %v115 = vunpack.c.l.b16 %v47
    %v116 = vunpack.c.l.b16 %v48
    %v117 = vpack.c.b16 %v102, %v101
    %v118 = vpack.c.b16 %v104, %v103
    %v119 = vpack.c.b16 %v106, %v105
    %v120 = vpack.c.b16 %v108, %v107
    %v121 = vpack.c.b16 %v110, %v109
    %v122 = vpack.c.b16 %v112, %v111
    %v123 = vpack.c.b16 %v114, %v113
    %v124 = vpack.c.b16 %v116, %v115
    %133 = vmatprep.subr.bf16.mxu0 0
    %134 = vmatpush1.bf16.msra.mxu0 %v117
    %135 = vmatprep.subr.bf16.mxu0 0
    %136 = vmatpush1.bf16.msra.mxu0 %v118
    %137 = vmatprep.subr.bf16.mxu0 0
    %138 = vmatpush1.bf16.msra.mxu0 %v119
    %139 = vmatprep.subr.bf16.mxu0 0
    %140 = vmatpush1.bf16.msra.mxu0 %v120
    %141 = vmatprep.subr.bf16.mxu0 0
    %142 = vmatpush1.bf16.msra.mxu0 %v121
    %143 = vmatprep.subr.bf16.mxu0 0
    %144 = vmatpush1.bf16.msra.mxu0 %v122
    %145 = vmatprep.subr.bf16.mxu0 0
    %146 = vmatpush1.bf16.msra.mxu0 %v123
    %147 = vmatprep.subr.bf16.mxu0 0
    %148 = vmatpush1.bf16.msra.mxu0 %v124
    %149 = vmatprep.subr.bf16.mxu0 0
    %150 = vmatpush1.bf16.msra.mxu0 0
    %151 = vmatprep.subr.bf16.mxu0 0
    %152 = vmatpush1.bf16.msra.mxu0 0
    %153 = vmatprep.subr.bf16.mxu0 0
    %154 = vmatpush1.bf16.msra.mxu0 0
    %155 = vmatprep.subr.bf16.mxu0 0
    %156 = vmatpush1.bf16.msra.mxu0 0
    %157 = vmatprep.subr.bf16.mxu0 0
    %158 = vmatpush1.bf16.msra.mxu0 0
    %159 = vmatprep.subr.bf16.mxu0 0
    %160 = vmatpush1.bf16.msra.mxu0 0
    %161 = vmatprep.subr.bf16.mxu0 0
    %162 = vmatpush1.bf16.msra.mxu0 0
    %163 = vmatprep.subr.bf16.mxu0 0
    %164 = vmatpush1.bf16.msra.mxu0 0
    %165 = vmatprep.mubr.bf16.mxu0 0
    %166 = vmatmul.mubr.bf16.gmra.mrb[0].mxu0 %v30
    %v167 = vpop.f32.mrb[0].mxu0
    %v168 = vadd.f32 %v84, %v167
    %v169 = vpop.f32.mrb[0].mxu0
    %v170 = vpop.f32.mrb[0].mxu0
    %v171 = vpop.f32.mrb[0].mxu0
    %172 = vdwg.mxu0
    %v173 = vxor.u32 %v168, 2147483648
    %v174 = vmul.f32 %v173, 1.442695
    %v175 = vpow.pop %v174
    %v176 = vadd.f32 %v175, 1.0
    %v177 = vrcp.pop %v176
    %v178 = vmul.f32 1.0, %v177
    %v179 = vmul.f32 %v168, %v178
    %v180 = vxor.u32 %v31, 2147483648
    %v181 = vmul.f32 %v180, 1.442695
    %v182 = vpow.pop %v181
    %v183 = vadd.f32 %v182, 1.0
    %v184 = vrcp.pop %v183
    %v185 = vmul.f32 1.0, %v184
    %v186 = vmul.f32 %v31, %v185
    %v187 = vsub.f32 %v31, 1.0
    %v188 = vlaneseq
    %v189 = vshrl.u32 %v188, 7
    %v190 = vsub.s32 6, %v189
    %v191 = vrot.slane %v32, %v190
    %193 = vset.pattern.permute.xlu0 72
    %194 = vperm.xlu0 %193, %v187
    %v195 = vpop.permute.xlu0 %194
    %v197 = vmul.f32 %v191, %v195
    %v198 = vadd.f32 %v197, 1.0
    %v199 = vmul.f32 %v186, %v198
    %v200 = vpack.c.bf16 %v199, %v199
    %v217 = vunpack.c.l.b16 %v49
    %v218 = vunpack.c.l.b16 %v50
    %v219 = vunpack.c.l.b16 %v51
    %v220 = vunpack.c.l.b16 %v52
    %v221 = vunpack.c.l.b16 %v53
    %v222 = vunpack.c.l.b16 %v54
    %v223 = vunpack.c.l.b16 %v55
    %v224 = vunpack.c.l.b16 %v56
    %v225 = vunpack.c.l.b16 %v57
    %v226 = vunpack.c.l.b16 %v58
    %v227 = vunpack.c.l.b16 %v59
    %v228 = vunpack.c.l.b16 %v60
    %v229 = vunpack.c.l.b16 %v61
    %v230 = vunpack.c.l.b16 %v62
    %v231 = vunpack.c.l.b16 %v63
    %v232 = vunpack.c.l.b16 %v64
    %v233 = vpack.c.b16 %v218, %v217
    %v234 = vpack.c.b16 %v220, %v219
    %v235 = vpack.c.b16 %v222, %v221
    %v236 = vpack.c.b16 %v224, %v223
    %v237 = vpack.c.b16 %v226, %v225
    %v238 = vpack.c.b16 %v228, %v227
    %v239 = vpack.c.b16 %v230, %v229
    %v240 = vpack.c.b16 %v232, %v231
    %249 = vmatprep.subr.bf16.mxu0 0
    %250 = vmatpush1.bf16.msra.mxu0 %v233
    %251 = vmatprep.subr.bf16.mxu0 0
    %252 = vmatpush1.bf16.msra.mxu0 %v234
    %253 = vmatprep.subr.bf16.mxu0 0
    %254 = vmatpush1.bf16.msra.mxu0 %v235
    %255 = vmatprep.subr.bf16.mxu0 0
    %256 = vmatpush1.bf16.msra.mxu0 %v236
    %257 = vmatprep.subr.bf16.mxu0 0
    %258 = vmatpush1.bf16.msra.mxu0 %v237
    %259 = vmatprep.subr.bf16.mxu0 0
    %260 = vmatpush1.bf16.msra.mxu0 %v238
    %261 = vmatprep.subr.bf16.mxu0 0
    %262 = vmatpush1.bf16.msra.mxu0 %v239
    %263 = vmatprep.subr.bf16.mxu0 0
    %264 = vmatpush1.bf16.msra.mxu0 %v240
    %265 = vmatprep.subr.bf16.mxu0 0
    %266 = vmatpush1.bf16.msra.mxu0 0
    %267 = vmatprep.subr.bf16.mxu0 0
    %268 = vmatpush1.bf16.msra.mxu0 0
    %269 = vmatprep.subr.bf16.mxu0 0
    %270 = vmatpush1.bf16.msra.mxu0 0
    %271 = vmatprep.subr.bf16.mxu0 0
    %272 = vmatpush1.bf16.msra.mxu0 0
    %273 = vmatprep.subr.bf16.mxu0 0
    %274 = vmatpush1.bf16.msra.mxu0 0
    %275 = vmatprep.subr.bf16.mxu0 0
    %276 = vmatpush1.bf16.msra.mxu0 0
    %277 = vmatprep.subr.bf16.mxu0 0
    %278 = vmatpush1.bf16.msra.mxu0 0
    %279 = vmatprep.subr.bf16.mxu0 0
    %280 = vmatpush1.bf16.msra.mxu0 0
    %281 = vmatprep.mubr.bf16.mxu0 0
    %282 = vmatmul.mubr.bf16.gmra.mrb[0].mxu0 %v200
    %v283 = vpop.f32.mrb[0].mxu0
    %v284 = vadd.f32 0.0, %v283
    %v285 = vpop.f32.mrb[0].mxu0
    %v286 = vpop.f32.mrb[0].mxu0
    %v287 = vpop.f32.mrb[0].mxu0
    %288 = vdwg.mxu0
    %v289 = vadd.f32 %v179, %v284
    %v290 = vlaneseq
    %v291 = vshrl.u32 %v290, 7
    %v292 = vsub.s32 1, %v291
    %v293 = vrot.slane %v32, %v292
    %v294 = vadd.f32 %v289, %v293
    %v295 = vlaneseq
    %v296 = vshrl.u32 %v295, 7
    %v297 = vsub.s32 2, %v296
    %v298 = vrot.slane %v32, %v297
    %300 = vset.pattern.permute.xlu0 72
    %301 = vperm.xlu0 %300, %v31
    %v302 = vpop.permute.xlu0 %301
    %v304 = vmul.f32 %v298, %v302
    %v305 = vadd.f32 %v294, %v304
    %v306 = vpack.c.bf16 %v305, %v305
    %v307 = vlaneseq
    %v308 = vshrl.u32 %v307, 7
    %v309 = vsub.s32 3, %v308
    %v310 = vrot.slane %v32, %v309
    %v327 = vunpack.c.l.b16 %v65
    %v328 = vunpack.c.l.b16 %v66
    %v329 = vunpack.c.l.b16 %v67
    %v330 = vunpack.c.l.b16 %v68
    %v331 = vunpack.c.l.b16 %v69
    %v332 = vunpack.c.l.b16 %v70
    %v333 = vunpack.c.l.b16 %v71
    %v334 = vunpack.c.l.b16 %v72
    %v335 = vunpack.c.l.b16 %v73
    %v336 = vunpack.c.l.b16 %v74
    %v337 = vunpack.c.l.b16 %v75
    %v338 = vunpack.c.l.b16 %v76
    %v339 = vunpack.c.l.b16 %v77
    %v340 = vunpack.c.l.b16 %v78
    %v341 = vunpack.c.l.b16 %v79
    %v342 = vunpack.c.l.b16 %v80
    %v343 = vpack.c.b16 %v328, %v327
    %v344 = vpack.c.b16 %v330, %v329
    %v345 = vpack.c.b16 %v332, %v331
    %v346 = vpack.c.b16 %v334, %v333
    %v347 = vpack.c.b16 %v336, %v335
    %v348 = vpack.c.b16 %v338, %v337
    %v349 = vpack.c.b16 %v340, %v339
    %v350 = vpack.c.b16 %v342, %v341
    %359 = vmatprep.subr.bf16.mxu0 0
    %360 = vmatpush1.bf16.msra.mxu0 %v343
    %361 = vmatprep.subr.bf16.mxu0 0
    %362 = vmatpush1.bf16.msra.mxu0 %v344
    %363 = vmatprep.subr.bf16.mxu0 0
    %364 = vmatpush1.bf16.msra.mxu0 %v345
    %365 = vmatprep.subr.bf16.mxu0 0
    %366 = vmatpush1.bf16.msra.mxu0 %v346
    %367 = vmatprep.subr.bf16.mxu0 0
    %368 = vmatpush1.bf16.msra.mxu0 %v347
    %369 = vmatprep.subr.bf16.mxu0 0
    %370 = vmatpush1.bf16.msra.mxu0 %v348
    %371 = vmatprep.subr.bf16.mxu0 0
    %372 = vmatpush1.bf16.msra.mxu0 %v349
    %373 = vmatprep.subr.bf16.mxu0 0
    %374 = vmatpush1.bf16.msra.mxu0 %v350
    %375 = vmatprep.subr.bf16.mxu0 0
    %376 = vmatpush1.bf16.msra.mxu0 0
    %377 = vmatprep.subr.bf16.mxu0 0
    %378 = vmatpush1.bf16.msra.mxu0 0
    %379 = vmatprep.subr.bf16.mxu0 0
    %380 = vmatpush1.bf16.msra.mxu0 0
    %381 = vmatprep.subr.bf16.mxu0 0
    %382 = vmatpush1.bf16.msra.mxu0 0
    %383 = vmatprep.subr.bf16.mxu0 0
    %384 = vmatpush1.bf16.msra.mxu0 0
    %385 = vmatprep.subr.bf16.mxu0 0
    %386 = vmatpush1.bf16.msra.mxu0 0
    %387 = vmatprep.subr.bf16.mxu0 0
    %388 = vmatpush1.bf16.msra.mxu0 0
    %389 = vmatprep.subr.bf16.mxu0 0
    %390 = vmatpush1.bf16.msra.mxu0 0
    %391 = vmatprep.mubr.bf16.mxu0 0
    %392 = vmatmul.mubr.bf16.gmra.mrb[0].mxu0 %v306
    %v393 = vpop.f32.mrb[0].mxu0
    %v394 = vadd.f32 %v310, %v393
    %v395 = vpop.f32.mrb[0].mxu0
    %v396 = vpop.f32.mrb[0].mxu0
    %v397 = vpop.f32.mrb[0].mxu0
    %398 = vdwg.mxu0
    %399 = vadd.xlane.f32.xlu0 %v394
    %v400 = vpop.xlane.xlu0 %399
    %v401 = vmul.f32 %v400, 0.03125
    %v402 = vsub.f32 %v394, %v401
    %v403 = vlaneseq
    %v404 = vshrl.u32 %v403, 7
    %v405 = vsub.s32 7, %v404
    %v406 = vrot.slane %v32, %v405
    %v407 = vmul.f32 %v402, %v406
    %v408 = vmul.f32 %v407, %v407
    %409 = vadd.xlane.f32.xlu0 %v408
    %v410 = vpop.xlane.xlu0 %409
    %v411 = vmul.f32 %v410, 0.03125
    %v412 = vadd.f32 %v411, 1e-06
    %v413 = vrsqrt.pop %v412
    %v414 = vmul.f32 %v407, %v413
    %v415 = vlaneseq
    %v416 = vshrl.u32 %v415, 7
    %v417 = vsub.s32 4, %v416
    %v418 = vrot.slane %v32, %v417
    %v419 = vmul.f32 %v414, %v418
    %v420 = vlaneseq
    %v421 = vshrl.u32 %v420, 7
    %v422 = vsub.s32 5, %v421
    %v423 = vrot.slane %v32, %v422
    %v424 = vadd.f32 %v419, %v423
    %v425 = vxor.u32 %v424, 2147483648
    %v426 = vmul.f32 %v425, 1.442695
    %v427 = vpow.pop %v426
    %v428 = vadd.f32 %v427, 1.0
    %v429 = vrcp.pop %v428
    %v430 = vmul.f32 1.0, %v429
    %v431 = vmul.f32 %v424, %v430
    %v432 = vpack.c.bf16 %v431, %v431
    %433 = vst [vmem:[#allocation5] sm:$0xf] %v432
    // Predicated region
    $region18: #{embedx_forward.1} parent=1 // pred_check
      _
    $region19: #{embedx_forward.1} parent=1 // pred_check_branch
      %435 = sbr.rel (0) target = $region21
    $region20: #{embedx_forward.1} parent=1 // pred_region
      %s437 = ssub.s32 64, 64
      %438 = vsyncadd [#allocation4], %s437
      %s440 = sshll.u32 [#allocation5], 4
      %s441 = int_to_ptr.vmem [resolvable:$true] %s440
      %443 = dma.vmem_to_hbm [thread:$0]  %s441, 64, %s3, [#allocation4]
    $region21: #{embedx_forward.1} parent=1 // pred_fallthru
      _
    // Predicated region
    $region22: #{embedx_forward.1} parent=1 // pred_check
      _
    $region23: #{embedx_forward.1} parent=1 // pred_check_branch
      %445 = sbr.rel (0) target = $region25
    $region24: #{embedx_forward.1} parent=1 // pred_region
      %446 = dma.done [#allocation4], 64
    $region25: #{embedx_forward.1} parent=1 // pred_fallthru
      _
    %447 = vsyncpa [#allocation3], 1
    %448 = vsyncpa [#allocation4], 1

</llo_original>
